<compile_context>
chip_gen: v6e
topology: v6e:2x2x1
jax: 0.10.0
libtpu: 0.0.40
codegen_flags: <defaults>
</compile_context>

<pallas_src>
import functools

import jax
import jax.numpy as jnp
from jax.experimental import pallas as pl
from jax.experimental.pallas import tpu as pltpu

E_CHAR = 50      # char embedding size (fixed by the module)
KERNEL = 5       # conv kernel width (fixed by the module)
LANE = 128       # TPU lane width


def _round_up(x, m):
    return (x + m - 1) // m * m


def _model_embeddings_kernel(x_ref,     # (L, block_n, E_CHAR)   bf16 embedded chars
                             wc_ref,    # (KERNEL, E_CHAR, C_pad) bf16 conv weight (tap-major)
                             bc_ref,    # (1, C_pad)              f32 conv bias
                             wpg_ref,   # (C_pad, 2*C_pad)        bf16 fused highway weight
                             bpg_ref,   # (1, 2*C_pad)            f32 fused highway bias
                             o_ref):    # (block_n, C_pad)        f32 word embeddings
    L, bn, e_char = x_ref.shape
    c_pad = o_ref.shape[1]
    l_out = L - KERNEL + 1

    # ---- Conv1d: KERNEL big matmuls (M = L*block_n), shifted-add along leading axis ----
    x_flat = x_ref[...].reshape(L * bn, e_char)                  # bf16, leading-dim merge
    conv = None
    for k in range(KERNEL):                                      # static, tiny trip count
        y_k = jnp.dot(x_flat, wc_ref[k],
                      preferred_element_type=jnp.float32)        # (L*bn, C_pad) f32
        y_k = y_k.reshape(L, bn, c_pad)
        contrib = y_k[k:k + l_out]                               # slice on untiled leading dim
        conv = contrib if conv is None else conv + contrib       # (l_out, bn, C_pad)

    # Bias + ReLU hoisted out of the time axis (both monotone -> exact w.r.t. max-over-time).
    h = jnp.maximum(jnp.max(conv, axis=0) + bc_ref[...], 0.0)    # (bn, C_pad) f32

    # ---- Highway: single fused proj/gate matmul, then split ----
    pg = jnp.dot(h.astype(wpg_ref.dtype), wpg_ref[...],
                 preferred_element_type=jnp.float32) + bpg_ref[...]   # (bn, 2*C_pad) f32
    proj = jnp.maximum(pg[:, :c_pad], 0.0)
    gate = jax.nn.sigmoid(pg[:, c_pad:])
    out = gate * proj + (1.0 - gate) * h
    # TODO(synk): dropout(p=0.3) omitted (eval mode); add pltpu.prng_* masking for training.
    o_ref[...] = out.astype(o_ref.dtype)


@functools.partial(jax.jit, static_argnames=("embed_size", "block_n"))
def model_embeddings_forward(char_ids, params, embed_size, block_n=128):
    """char_ids: int32 (sent_len, batch, max_word_len) -> f32 (sent_len, batch, embed_size)."""
    sent_len, batch, max_word_len = char_ids.shape
    if max_word_len < KERNEL:
        raise ValueError(
            f"max_word_len ({max_word_len}) must be >= conv kernel width ({KERNEL})")

    n = sent_len * batch
    c_pad = _round_up(max(embed_size, LANE), LANE)               # lane-dense channel dim
    bn = min(block_n, _round_up(n, 8))                           # N-tile (multiple of 8)
    n_pad = _round_up(n, bn)
    grid = (n_pad // bn,)

    # --- glue: char-embedding gather in word-length-major layout (L, n, e_char) ---
    idx = jnp.transpose(char_ids.reshape(n, max_word_len), (1, 0))           # (L, n) int32
    emb = jnp.take(params["embedding"].astype(jnp.bfloat16), idx, axis=0)    # (L, n, e_char)
    if n_pad != n:
        emb = jnp.pad(emb, ((0, 0), (0, n_pad - n), (0, 0)))

    # conv weight: torch (C_out, e_char, K) -> (K, e_char, C_pad), channels zero-padded
    wc = jnp.transpose(params["conv_w"], (2, 1, 0))
    wc = jnp.pad(wc, ((0, 0), (0, 0), (0, c_pad - embed_size))).astype(jnp.bfloat16)
    bc = jnp.pad(params["conv_b"], (0, c_pad - embed_size)
                 ).reshape(1, c_pad).astype(jnp.float32)

    # highway: fuse proj & gate into one (C_pad, 2*C_pad) weight and (1, 2*C_pad) bias
    def _pad_lin(w):   # torch (out, in) -> (in=C_pad, out=C_pad), zero-padded
        return jnp.pad(w.T, ((0, c_pad - embed_size), (0, c_pad - embed_size)))

    wpg = jnp.concatenate([_pad_lin(params["proj_w"]), _pad_lin(params["gate_w"])],
                          axis=1).astype(jnp.bfloat16)                       # (C_pad, 2*C_pad)
    bpg = jnp.concatenate([jnp.pad(params["proj_b"], (0, c_pad - embed_size)),
                           jnp.pad(params["gate_b"], (0, c_pad - embed_size))]
                          ).reshape(1, 2 * c_pad).astype(jnp.float32)

    out = pl.pallas_call(
        _model_embeddings_kernel,
        out_shape=jax.ShapeDtypeStruct((n_pad, c_pad), jnp.float32),
        grid=grid,
        in_specs=[
            pl.BlockSpec((max_word_len, bn, E_CHAR), lambda i: (0, i, 0)),   # x tile
            pl.BlockSpec((KERNEL, E_CHAR, c_pad), lambda i: (0, 0, 0)),      # resident weights
            pl.BlockSpec((1, c_pad), lambda i: (0, 0)),
            pl.BlockSpec((c_pad, 2 * c_pad), lambda i: (0, 0)),
            pl.BlockSpec((1, 2 * c_pad), lambda i: (0, 0)),
        ],
        out_specs=pl.BlockSpec((bn, c_pad), lambda i: (i, 0)),
        compiler_params=pltpu.CompilerParams(dimension_semantics=("parallel",)),
    )(emb, wc, bc, wpg, bpg)

    return out[:n, :embed_size].reshape(sent_len, batch, embed_size)


def init_params(key, vocab_size, embed_size, pad_idx=0):
    k0, k1, k2, k3, k4, k5, k6 = jax.random.split(key, 7)
    emb = jax.random.normal(k0, (vocab_size, E_CHAR), jnp.float32) * 0.1
    emb = emb.at[pad_idx].set(0.0)               # nn.Embedding padding_idx semantics
    return {
        "embedding": emb,
        "conv_w": jax.random.normal(k1, (embed_size, E_CHAR, KERNEL), jnp.float32) * 0.05,
        "conv_b": jax.random.normal(k2, (embed_size,), jnp.float32) * 0.01,
        "proj_w": jax.random.normal(k3, (embed_size, embed_size), jnp.float32) * 0.05,
        "proj_b": jax.random.normal(k4, (embed_size,), jnp.float32) * 0.01,
        "gate_w": jax.random.normal(k5, (embed_size, embed_size), jnp.float32) * 0.05,
        "gate_b": jax.random.normal(k6, (embed_size,), jnp.float32) * 0.01,
    }


if __name__ == "__main__":
    sent_len, batch, max_word_len = 4, 2, 12
    vocab_size, embed_size, pad_idx = 30, 32, 0

    key = jax.random.PRNGKey(0)
    pkey, ikey = jax.random.split(key)
    params = init_params(pkey, vocab_size, embed_size, pad_idx)
    char_ids = jax.random.randint(ikey, (sent_len, batch, max_word_len), 0, vocab_size,
                                  dtype=jnp.int32)

    out = model_embeddings_forward(char_ids, params, embed_size)
    out = jax.block_until_ready(out)
    assert out.shape == (sent_len, batch, embed_size)
    assert bool(jnp.all(jnp.isfinite(out)))
    print("KERNEL_OK")
</pallas_src>

<mosaic_0001>
module attributes {stable_mosaic.version = 11 : i64} {
  func.func @_model_embeddings_kernel(%arg0: i32, %arg1: memref<12x8x50xbf16, #tpu.memory_space<vmem>>, %arg2: memref<5x50x128xbf16, #tpu.memory_space<vmem>>, %arg3: memref<1x128xf32, #tpu.memory_space<vmem>>, %arg4: memref<128x256xbf16, #tpu.memory_space<vmem>>, %arg5: memref<1x256xf32, #tpu.memory_space<vmem>>, %arg6: memref<8x128xf32, #tpu.memory_space<vmem>>) attributes {dimension_semantics = [#tpu.dimension_semantics<parallel>], iteration_bounds = array<i64: 1>, scalar_prefetch = 0 : i64, scratch_operands = 0 : i64, tpu.core_type = #tpu.core_type<tc>, window_params = [{transform_indices = @transform_0, window_bounds = array<i64: 12, 8, 50>}, {pipeline_mode = #tpu.pipeline_mode<synchronous>, transform_indices = @transform_1, window_bounds = array<i64: 5, 50, 128>}, {pipeline_mode = #tpu.pipeline_mode<synchronous>, transform_indices = @transform_2, window_bounds = array<i64: 1, 128>}, {pipeline_mode = #tpu.pipeline_mode<synchronous>, transform_indices = @transform_3, window_bounds = array<i64: 128, 256>}, {pipeline_mode = #tpu.pipeline_mode<synchronous>, transform_indices = @transform_4, window_bounds = array<i64: 1, 256>}, {transform_indices = @transform_5, window_bounds = array<i64: 8, 128>}]} {
    %c0 = arith.constant 0 : index
    %c0_0 = arith.constant 0 : index
    %c0_1 = arith.constant 0 : index
    %0 = vector.load %arg1[%c0, %c0_0, %c0_1] : memref<12x8x50xbf16, #tpu.memory_space<vmem>>, vector<12x8x50xbf16>
    %1 = vector.shape_cast %0 : vector<12x8x50xbf16> to vector<96x50xbf16>
    %c0_2 = arith.constant 0 : index
    %c0_3 = arith.constant 0 : index
    %c0_4 = arith.constant 0 : index
    %2 = vector.load %arg2[%c0_2, %c0_3, %c0_4] : memref<5x50x128xbf16, #tpu.memory_space<vmem>>, vector<1x50x128xbf16>
    %3 = vector.shape_cast %2 : vector<1x50x128xbf16> to vector<50x128xbf16>
    %cst = arith.constant dense<0.000000e+00> : vector<96x128xf32>
    %4 = tpu.matmul %1, %3, %cst {dimension_numbers = #tpu.dot_dimension_numbers<[1], [0], [0], [1], [0, 0, 1, 1], [], []>} : vector<96x50xbf16>, vector<50x128xbf16>, vector<96x128xf32> -> vector<96x128xf32>
    %5 = vector.shape_cast %4 : vector<96x128xf32> to vector<12x8x128xf32>
    %6 = vector.extract_strided_slice %5 {offsets = [0, 0, 0], sizes = [8, 8, 128], strides = [1, 1, 1]} : vector<12x8x128xf32> to vector<8x8x128xf32>
    %c1 = arith.constant 1 : index
    %c0_5 = arith.constant 0 : index
    %c0_6 = arith.constant 0 : index
    %7 = vector.load %arg2[%c1, %c0_5, %c0_6] : memref<5x50x128xbf16, #tpu.memory_space<vmem>>, vector<1x50x128xbf16>
    %8 = vector.shape_cast %7 : vector<1x50x128xbf16> to vector<50x128xbf16>
    %cst_7 = arith.constant dense<0.000000e+00> : vector<96x128xf32>
    %9 = tpu.matmul %1, %8, %cst_7 {dimension_numbers = #tpu.dot_dimension_numbers<[1], [0], [0], [1], [0, 0, 1, 1], [], []>} : vector<96x50xbf16>, vector<50x128xbf16>, vector<96x128xf32> -> vector<96x128xf32>
    %10 = vector.shape_cast %9 : vector<96x128xf32> to vector<12x8x128xf32>
    %11 = vector.extract_strided_slice %10 {offsets = [1, 0, 0], sizes = [8, 8, 128], strides = [1, 1, 1]} : vector<12x8x128xf32> to vector<8x8x128xf32>
    %12 = arith.addf %6, %11 : vector<8x8x128xf32>
    %c2 = arith.constant 2 : index
    %c0_8 = arith.constant 0 : index
    %c0_9 = arith.constant 0 : index
    %13 = vector.load %arg2[%c2, %c0_8, %c0_9] : memref<5x50x128xbf16, #tpu.memory_space<vmem>>, vector<1x50x128xbf16>
    %14 = vector.shape_cast %13 : vector<1x50x128xbf16> to vector<50x128xbf16>
    %cst_10 = arith.constant dense<0.000000e+00> : vector<96x128xf32>
    %15 = tpu.matmul %1, %14, %cst_10 {dimension_numbers = #tpu.dot_dimension_numbers<[1], [0], [0], [1], [0, 0, 1, 1], [], []>} : vector<96x50xbf16>, vector<50x128xbf16>, vector<96x128xf32> -> vector<96x128xf32>
    %16 = vector.shape_cast %15 : vector<96x128xf32> to vector<12x8x128xf32>
    %17 = vector.extract_strided_slice %16 {offsets = [2, 0, 0], sizes = [8, 8, 128], strides = [1, 1, 1]} : vector<12x8x128xf32> to vector<8x8x128xf32>
    %18 = arith.addf %12, %17 : vector<8x8x128xf32>
    %c3 = arith.constant 3 : index
    %c0_11 = arith.constant 0 : index
    %c0_12 = arith.constant 0 : index
    %19 = vector.load %arg2[%c3, %c0_11, %c0_12] : memref<5x50x128xbf16, #tpu.memory_space<vmem>>, vector<1x50x128xbf16>
    %20 = vector.shape_cast %19 : vector<1x50x128xbf16> to vector<50x128xbf16>
    %cst_13 = arith.constant dense<0.000000e+00> : vector<96x128xf32>
    %21 = tpu.matmul %1, %20, %cst_13 {dimension_numbers = #tpu.dot_dimension_numbers<[1], [0], [0], [1], [0, 0, 1, 1], [], []>} : vector<96x50xbf16>, vector<50x128xbf16>, vector<96x128xf32> -> vector<96x128xf32>
    %22 = vector.shape_cast %21 : vector<96x128xf32> to vector<12x8x128xf32>
    %23 = vector.extract_strided_slice %22 {offsets = [3, 0, 0], sizes = [8, 8, 128], strides = [1, 1, 1]} : vector<12x8x128xf32> to vector<8x8x128xf32>
    %24 = arith.addf %18, %23 : vector<8x8x128xf32>
    %c4 = arith.constant 4 : index
    %c0_14 = arith.constant 0 : index
    %c0_15 = arith.constant 0 : index
    %25 = vector.load %arg2[%c4, %c0_14, %c0_15] : memref<5x50x128xbf16, #tpu.memory_space<vmem>>, vector<1x50x128xbf16>
    %26 = vector.shape_cast %25 : vector<1x50x128xbf16> to vector<50x128xbf16>
    %cst_16 = arith.constant dense<0.000000e+00> : vector<96x128xf32>
    %27 = tpu.matmul %1, %26, %cst_16 {dimension_numbers = #tpu.dot_dimension_numbers<[1], [0], [0], [1], [0, 0, 1, 1], [], []>} : vector<96x50xbf16>, vector<50x128xbf16>, vector<96x128xf32> -> vector<96x128xf32>
    %28 = vector.shape_cast %27 : vector<96x128xf32> to vector<12x8x128xf32>
    %29 = vector.extract_strided_slice %28 {offsets = [4, 0, 0], sizes = [8, 8, 128], strides = [1, 1, 1]} : vector<12x8x128xf32> to vector<8x8x128xf32>
    %30 = arith.addf %24, %29 : vector<8x8x128xf32>
    %cst_17 = arith.constant dense<0xFF800000> : vector<8x128xf32>
    %31 = vector.multi_reduction <maximumf>, %30, %cst_17 [0] : vector<8x8x128xf32> to vector<8x128xf32>
    %c0_18 = arith.constant 0 : index
    %c0_19 = arith.constant 0 : index
    %32 = vector.load %arg3[%c0_18, %c0_19] : memref<1x128xf32, #tpu.memory_space<vmem>>, vector<1x128xf32>
    %33 = vector.broadcast %32 : vector<1x128xf32> to vector<8x128xf32>
    %34 = arith.addf %31, %33 : vector<8x128xf32>
    %cst_20 = arith.constant 0.000000e+00 : f32
    %35 = vector.broadcast %cst_20 : f32 to vector<8x128xf32>
    %36 = arith.maximumf %34, %35 : vector<8x128xf32>
    %37 = arith.truncf %36 : vector<8x128xf32> to vector<8x128xbf16>
    %c0_21 = arith.constant 0 : index
    %c0_22 = arith.constant 0 : index
    %38 = vector.load %arg4[%c0_21, %c0_22] : memref<128x256xbf16, #tpu.memory_space<vmem>>, vector<128x256xbf16>
    %cst_23 = arith.constant dense<0.000000e+00> : vector<8x256xf32>
    %39 = tpu.matmul %37, %38, %cst_23 {dimension_numbers = #tpu.dot_dimension_numbers<[1], [0], [0], [1], [0, 0, 1, 1], [], []>} : vector<8x128xbf16>, vector<128x256xbf16>, vector<8x256xf32> -> vector<8x256xf32>
    %c0_24 = arith.constant 0 : index
    %c0_25 = arith.constant 0 : index
    %40 = vector.load %arg5[%c0_24, %c0_25] : memref<1x256xf32, #tpu.memory_space<vmem>>, vector<1x256xf32>
    %41 = vector.broadcast %40 : vector<1x256xf32> to vector<8x256xf32>
    %42 = arith.addf %39, %41 : vector<8x256xf32>
    %43 = vector.extract_strided_slice %42 {offsets = [0, 0], sizes = [8, 128], strides = [1, 1]} : vector<8x256xf32> to vector<8x128xf32>
    %cst_26 = arith.constant 0.000000e+00 : f32
    %44 = vector.broadcast %cst_26 : f32 to vector<8x128xf32>
    %45 = arith.maximumf %43, %44 : vector<8x128xf32>
    %46 = vector.extract_strided_slice %42 {offsets = [0, 128], sizes = [8, 128], strides = [1, 1]} : vector<8x256xf32> to vector<8x128xf32>
    %47 = arith.negf %46 : vector<8x128xf32>
    %48 = math.exp %47 : vector<8x128xf32>
    %cst_27 = arith.constant 1.000000e+00 : f32
    %49 = vector.broadcast %cst_27 : f32 to vector<8x128xf32>
    %50 = arith.addf %49, %48 : vector<8x128xf32>
    %51 = arith.divf %49, %50 : vector<8x128xf32>
    %52 = arith.mulf %51, %45 : vector<8x128xf32>
    %cst_28 = arith.constant 1.000000e+00 : f32
    %53 = vector.broadcast %cst_28 : f32 to vector<8x128xf32>
    %54 = arith.subf %53, %51 : vector<8x128xf32>
    %55 = arith.mulf %54, %36 : vector<8x128xf32>
    %56 = arith.addf %52, %55 : vector<8x128xf32>
    %c0_29 = arith.constant 0 : index
    %c0_30 = arith.constant 0 : index
    %57 = vector.load %arg6[%c0_29, %c0_30] : memref<8x128xf32, #tpu.memory_space<vmem>>, vector<8x128xf32>
    tpu.vector_store %arg6[%c0_29, %c0_30], %56 {strides = array<i32>} : memref<8x128xf32, #tpu.memory_space<vmem>>, vector<8x128xf32>,
    return
  }
  func.func @transform_0(%arg0: i32) -> (i32, i32, i32) {
    %c0_i32 = arith.constant 0 : i32
    %c0_i32_0 = arith.constant 0 : i32
    %c0_i32_1 = arith.constant 0 : i32
    return %c0_i32, %arg0, %c0_i32_0 : i32, i32, i32
  }
  func.func @transform_1(%arg0: i32) -> (i32, i32, i32) {
    %c0_i32 = arith.constant 0 : i32
    %c0_i32_0 = arith.constant 0 : i32
    %c0_i32_1 = arith.constant 0 : i32
    %c0_i32_2 = arith.constant 0 : i32
    return %c0_i32, %c0_i32_0, %c0_i32_1 : i32, i32, i32
  }
  func.func @transform_2(%arg0: i32) -> (i32, i32) {
    %c0_i32 = arith.constant 0 : i32
    %c0_i32_0 = arith.constant 0 : i32
    %c0_i32_1 = arith.constant 0 : i32
    return %c0_i32, %c0_i32_0 : i32, i32
  }
  func.func @transform_3(%arg0: i32) -> (i32, i32) {
    %c0_i32 = arith.constant 0 : i32
    %c0_i32_0 = arith.constant 0 : i32
    %c0_i32_1 = arith.constant 0 : i32
    return %c0_i32, %c0_i32_0 : i32, i32
  }
  func.func @transform_4(%arg0: i32) -> (i32, i32) {
    %c0_i32 = arith.constant 0 : i32
    %c0_i32_0 = arith.constant 0 : i32
    %c0_i32_1 = arith.constant 0 : i32
    return %c0_i32, %c0_i32_0 : i32, i32
  }
  func.func @transform_5(%arg0: i32) -> (i32, i32) {
    %c0_i32 = arith.constant 0 : i32
    %c0_i32_0 = arith.constant 0 : i32
    return %arg0, %c0_i32 : i32, i32
  }
}

</mosaic_0001>

<llo_original>
// kernel: model_embeddings_forward.1
$region0: #{model_embeddings_forward.1}
  #allocation0 [shape = 'u32[]', space=smem, size = 0x4, offset = 0x4, fixed_abs, tag = 'smem constant byte address 0x4 - core index']
  #allocation1 [shape = 'u32[144,128]{1,0:T(1,128)}', space=vmem, size = 0x12000, scoped, tag = 'internal scratch']
  %s0 = inlined_call_operand.vmem [shape: bf16[12,8,50], index: 0, kind: input, shape index: {}]
  %s1 = inlined_call_operand.vmem [shape: bf16[5,50,128], index: 1, kind: input, shape index: {}]
  %s2 = inlined_call_operand.vmem [shape: f32[1,128], index: 2, kind: input, shape index: {}]
  %s3 = inlined_call_operand.vmem [shape: bf16[128,256], index: 3, kind: input, shape index: {}]
  %s4 = inlined_call_operand.vmem [shape: f32[1,256], index: 4, kind: input, shape index: {}]
  %s5 = inlined_call_operand.hbm [shape: f32[8,128], index: 5, kind: output, shape index: {}]
  %s6 = sld [smem:[#allocation0]]
  $region30: #{model_embeddings_forward.1} parent=0
    _
  %s8 = ssub.s32 1, %s6
  %s9 = scalar_select 0, %s8, %s6
  $region1: #{model_embeddings_forward.1} parent=0
    #allocation2 [shape = 'u8[4096]{0}', space=vmem, size = 0x1000, scoped, tag = 'output window, operand 0, single buffered']
    #allocation3 [shape = 's32[1]{0}', space=sflag, size = 0x4, scoped, tag = 'scoped memory for model_embeddings_forward.1']
    %10 = vsyncpa [#allocation3], 0
    // Predicated region
    $region2: #{model_embeddings_forward.1} parent=1 // pred_check
      _
    $region3: #{model_embeddings_forward.1} parent=1 // pred_check_branch
      %12 = sbr.rel (0) target = $region5
    $region4: #{model_embeddings_forward.1} parent=1 // pred_region
      _
    $region5: #{model_embeddings_forward.1} parent=1 // pred_fallthru
      _
    // Predicated region
    $region6: #{model_embeddings_forward.1} parent=1 // pred_check
      _
    $region7: #{model_embeddings_forward.1} parent=1 // pred_check_branch
      %14 = sbr.rel (0) target = $region9
    $region8: #{model_embeddings_forward.1} parent=1 // pred_region
      _
    $region9: #{model_embeddings_forward.1} parent=1 // pred_fallthru
      _
    // Predicated region
    $region10: #{model_embeddings_forward.1} parent=1 // pred_check
      _
    $region11: #{model_embeddings_forward.1} parent=1 // pred_check_branch
      %16 = sbr.rel (0) target = $region13
    $region12: #{model_embeddings_forward.1} parent=1 // pred_region
      _
    $region13: #{model_embeddings_forward.1} parent=1 // pred_fallthru
      _
    // Predicated region
    $region14: #{model_embeddings_forward.1} parent=1 // pred_check
      _
    $region15: #{model_embeddings_forward.1} parent=1 // pred_check_branch
      %18 = sbr.rel (0) target = $region17
    $region16: #{model_embeddings_forward.1} parent=1 // pred_region
      _
    $region17: #{model_embeddings_forward.1} parent=1 // pred_fallthru
      _
    // Predicated region
    $region18: #{model_embeddings_forward.1} parent=1 // pred_check
      _
    $region19: #{model_embeddings_forward.1} parent=1 // pred_check_branch
      %20 = sbr.rel (0) target = $region21
    $region20: #{model_embeddings_forward.1} parent=1 // pred_region
      _
    $region21: #{model_embeddings_forward.1} parent=1 // pred_fallthru
      _
    %v22 = vld [vmem:[%s0] sm:$0xf]
    %v23 = vld [vmem:[%s0 + $0x4] sm:$0xf]
    %v24 = vld [vmem:[%s0 + $0x8] sm:$0xf]
    %v25 = vld [vmem:[%s0 + $0xc] sm:$0xf]
    %v26 = vld [vmem:[%s0 + $0x10] sm:$0xf]
    %v27 = vld [vmem:[%s0 + $0x14] sm:$0xf]
    %v28 = vld [vmem:[%s0 + $0x18] sm:$0xf]
    %v29 = vld [vmem:[%s0 + $0x1c] sm:$0xf]
    %v30 = vld [vmem:[%s0 + $0x20] sm:$0xf]
    %v31 = vld [vmem:[%s0 + $0x24] sm:$0xf]
    %v32 = vld [vmem:[%s0 + $0x28] sm:$0xf]
    %v33 = vld [vmem:[%s0 + $0x2c] sm:$0xf]
    %v34 = vld [vmem:[%s1] sm:$0xf]
    %v35 = vld [vmem:[%s1 + $0x4] sm:$0xf]
    %v36 = vld [vmem:[%s1 + $0x8] sm:$0xf]
    %v37 = vld [vmem:[%s1 + $0xc] sm:$0xf]
    %v38 = vld [vmem:[%s1 + $0x10] sm:$0xf]
    %v39 = vld [vmem:[%s1 + $0x14] sm:$0xf]
    %v40 = vld [vmem:[%s1 + $0x18] sm:$0x1]
    %v53 = vunpack.c.l.b16 %v22
    %v54 = vunpack.c.l.b16 %v23
    %v55 = vunpack.c.l.b16 %v24
    %v56 = vunpack.c.l.b16 %v25
    %v57 = vunpack.c.l.b16 %v26
    %v58 = vunpack.c.l.b16 %v27
    %v59 = vunpack.c.l.b16 %v28
    %v60 = vunpack.c.l.b16 %v29
    %v61 = vunpack.c.l.b16 %v30
    %v62 = vunpack.c.l.b16 %v31
    %v63 = vunpack.c.l.b16 %v32
    %v64 = vunpack.c.l.b16 %v33
    %v65 = vpack.c.b16 %v54, %v53
    %v66 = vpack.c.b16 %v56, %v55
    %v67 = vpack.c.b16 %v58, %v57
    %v68 = vpack.c.b16 %v60, %v59
    %v69 = vpack.c.b16 %v62, %v61
    %v70 = vpack.c.b16 %v64, %v63
    %v78 = vunpack.c.l.b16 %v34
    %v79 = vunpack.c.l.b16 %v35
    %v80 = vunpack.c.l.b16 %v36
    %v81 = vunpack.c.l.b16 %v37
    %v82 = vunpack.c.l.b16 %v38
    %v83 = vunpack.c.l.b16 %v39
    %v84 = vunpack.c.l.b16 %v40
    %v85 = vpack.c.b16 %v79, %v78
    %v86 = vpack.c.b16 %v81, %v80
    %v87 = vpack.c.b16 %v83, %v82
    %v88 = vpack.c.b16 %v84, %v84
    %vm92 = vcmask 408576
    %v94 = vsel %vm92, %v65, 0
    %v97 = vsel %vm92, %v66, 0
    %v100 = vsel %vm92, %v67, 0
    %v103 = vsel %vm92, %v68, 0
    %v106 = vsel %vm92, %v69, 0
    %v109 = vsel %vm92, %v70, 0
    %vm111 = vcmask 1040384
    %v113 = vsel %vm111, %v88, 0
    %115 = vmatprep.subr.bf16.mxu0 0
    %116 = vmatpush1.bf16.msra.mxu0 0
    %117 = vmatprep.subr.bf16.mxu0 0
    %118 = vmatpush1.bf16.msra.mxu0 0
    %119 = vmatprep.subr.bf16.mxu0 0
    %120 = vmatpush1.bf16.msra.mxu0 0
    %121 = vmatprep.subr.bf16.mxu0 0
    %122 = vmatpush1.bf16.msra.mxu0 0
    %123 = vmatprep.subr.bf16.mxu0 0
    %124 = vmatpush1.bf16.msra.mxu0 %v113
    %125 = vmatprep.subr.bf16.mxu0 0
    %126 = vmatpush1.bf16.msra.mxu0 %v87
    %127 = vmatprep.subr.bf16.mxu0 0
    %128 = vmatpush1.bf16.msra.mxu0 %v86
    %129 = vmatprep.subr.bf16.mxu0 0
    %130 = vmatpush1.bf16.msra.mxu0 %v85
    %131 = vmatprep.subr.bf16.mxu0 0
    %132 = vmatpush2.bf16.msra.mxu0 0
    %133 = vmatprep.subr.bf16.mxu0 0
    %134 = vmatpush2.bf16.msra.mxu0 0
    %135 = vmatprep.subr.bf16.mxu0 0
    %136 = vmatpush2.bf16.msra.mxu0 0
    %137 = vmatprep.subr.bf16.mxu0 0
    %138 = vmatpush2.bf16.msra.mxu0 0
    %139 = vmatprep.subr.bf16.mxu0 0
    %140 = vmatpush2.bf16.msra.mxu0 0
    %141 = vmatprep.subr.bf16.mxu0 0
    %142 = vmatpush2.bf16.msra.mxu0 0
    %143 = vmatprep.subr.bf16.mxu0 0
    %144 = vmatpush2.bf16.msra.mxu0 0
    %145 = vmatprep.subr.bf16.mxu0 0
    %146 = vmatpush2.bf16.msra.mxu0 0
    %147 = vmatprep.mubr.bf16.mxu0 0
    %148 = vmatmul.mubr.bf16.gmra.mxu0 %v94
    %v149 = vpop.f32.mrf.mxu0
    %v150 = vadd.f32 0.0, %v149
    %v151 = vpop.f32.mrf.mxu0
    %v152 = vpop.f32.mrf.mxu0
    %v153 = vadd.f32 0.0, %v152
    %v154 = vpop.f32.mrf.mxu0
    %155 = vmatprep.mubr.bf16.mxu0 0
    %156 = vmatmul.mubr.bf16.gmra.mxu0 %v97
    %v157 = vpop.f32.mrf.mxu0
    %v158 = vadd.f32 0.0, %v157
    %v159 = vpop.f32.mrf.mxu0
    %v160 = vpop.f32.mrf.mxu0
    %v161 = vadd.f32 0.0, %v160
    %v162 = vpop.f32.mrf.mxu0
    %163 = vmatprep.mubr.bf16.mxu0 0
    %164 = vmatmul.mubr.bf16.gmra.mxu0 %v100
    %v165 = vpop.f32.mrf.mxu0
    %v166 = vadd.f32 0.0, %v165
    %v167 = vpop.f32.mrf.mxu0
    %v168 = vpop.f32.mrf.mxu0
    %v169 = vadd.f32 0.0, %v168
    %v170 = vpop.f32.mrf.mxu0
    %171 = vmatprep.mubr.bf16.mxu0 0
    %172 = vmatmul.mubr.bf16.gmra.mxu0 %v103
    %v173 = vpop.f32.mrf.mxu0
    %v174 = vadd.f32 0.0, %v173
    %v175 = vpop.f32.mrf.mxu0
    %v176 = vpop.f32.mrf.mxu0
    %v177 = vadd.f32 0.0, %v176
    %v178 = vpop.f32.mrf.mxu0
    %179 = vmatprep.mubr.bf16.mxu0 0
    %180 = vmatmul.mubr.bf16.gmra.mxu0 %v106
    %v181 = vpop.f32.mrf.mxu0
    %v182 = vpop.f32.mrf.mxu0
    %v183 = vpop.f32.mrf.mxu0
    %v184 = vpop.f32.mrf.mxu0
    %185 = vmatprep.mubr.bf16.mxu0 0
    %186 = vmatmul.mubr.bf16.gmra.mxu0 %v109
    %v187 = vpop.f32.mrf.mxu0
    %v188 = vpop.f32.mrf.mxu0
    %v189 = vpop.f32.mrf.mxu0
    %v190 = vpop.f32.mrf.mxu0
    %191 = vdwg.mxu0
    %s192 = scalar_lea.vmem %s1, 28
    %v193 = vld [vmem:[%s192] sm:$0xf]
    %v194 = vld [vmem:[%s192 + $0x4] sm:$0xf]
    %v195 = vld [vmem:[%s192 + $0x8] sm:$0xf]
    %v196 = vld [vmem:[%s192 + $0xc] sm:$0xf]
    %v197 = vld [vmem:[%s192 + $0x10] sm:$0xf]
    %v198 = vld [vmem:[%s192 + $0x14] sm:$0xf]
    %v199 = vld [vmem:[%s192 + $0x18] sm:$0x1]
    %v207 = vunpack.c.l.b16 %v193
    %v208 = vunpack.c.l.b16 %v194
    %v209 = vunpack.c.l.b16 %v195
    %v210 = vunpack.c.l.b16 %v196
    %v211 = vunpack.c.l.b16 %v197
    %v212 = vunpack.c.l.b16 %v198
    %v213 = vunpack.c.l.b16 %v199
    %v214 = vpack.c.b16 %v208, %v207
    %v215 = vpack.c.b16 %v210, %v209
    %v216 = vpack.c.b16 %v212, %v211
    %v217 = vpack.c.b16 %v213, %v213
    %v222 = vsel %vm111, %v217, 0
    %224 = vmatprep.subr.bf16.mxu0 0
    %225 = vmatpush1.bf16.msra.mxu0 0
    %226 = vmatprep.subr.bf16.mxu0 0
    %227 = vmatpush1.bf16.msra.mxu0 0
    %228 = vmatprep.subr.bf16.mxu0 0
    %229 = vmatpush1.bf16.msra.mxu0 0
    %230 = vmatprep.subr.bf16.mxu0 0
    %231 = vmatpush1.bf16.msra.mxu0 0
    %232 = vmatprep.subr.bf16.mxu0 0
    %233 = vmatpush1.bf16.msra.mxu0 %v222
    %234 = vmatprep.subr.bf16.mxu0 0
    %235 = vmatpush1.bf16.msra.mxu0 %v216
    %236 = vmatprep.subr.bf16.mxu0 0
    %237 = vmatpush1.bf16.msra.mxu0 %v215
    %238 = vmatprep.subr.bf16.mxu0 0
    %239 = vmatpush1.bf16.msra.mxu0 %v214
    %240 = vmatprep.subr.bf16.mxu0 0
    %241 = vmatpush2.bf16.msra.mxu0 0
    %242 = vmatprep.subr.bf16.mxu0 0
    %243 = vmatpush2.bf16.msra.mxu0 0
    %244 = vmatprep.subr.bf16.mxu0 0
    %245 = vmatpush2.bf16.msra.mxu0 0
    %246 = vmatprep.subr.bf16.mxu0 0
    %247 = vmatpush2.bf16.msra.mxu0 0
    %248 = vmatprep.subr.bf16.mxu0 0
    %249 = vmatpush2.bf16.msra.mxu0 0
    %250 = vmatprep.subr.bf16.mxu0 0
    %251 = vmatpush2.bf16.msra.mxu0 0
    %252 = vmatprep.subr.bf16.mxu0 0
    %253 = vmatpush2.bf16.msra.mxu0 0
    %254 = vmatprep.subr.bf16.mxu0 0
    %255 = vmatpush2.bf16.msra.mxu0 0
    %256 = vmatprep.mubr.bf16.mxu0 0
    %257 = vmatmul.mubr.bf16.gmra.mxu0 %v94
    %v258 = vpop.f32.mrf.mxu0
    %v259 = vpop.f32.mrf.mxu0
    %v260 = vpop.f32.mrf.mxu0
    %v261 = vadd.f32 0.0, %v260
    %v262 = vpop.f32.mrf.mxu0
    %263 = vmatprep.mubr.bf16.mxu0 0
    %264 = vmatmul.mubr.bf16.gmra.mxu0 %v97
    %v265 = vpop.f32.mrf.mxu0
    %v266 = vadd.f32 0.0, %v265
    %v267 = vpop.f32.mrf.mxu0
    %v268 = vpop.f32.mrf.mxu0
    %v269 = vadd.f32 0.0, %v268
    %v270 = vpop.f32.mrf.mxu0
    %271 = vmatprep.mubr.bf16.mxu0 0
    %272 = vmatmul.mubr.bf16.gmra.mxu0 %v100
    %v273 = vpop.f32.mrf.mxu0
    %v274 = vadd.f32 0.0, %v273
    %v275 = vpop.f32.mrf.mxu0
    %v276 = vpop.f32.mrf.mxu0
    %v277 = vadd.f32 0.0, %v276
    %v278 = vpop.f32.mrf.mxu0
    %279 = vmatprep.mubr.bf16.mxu0 0
    %280 = vmatmul.mubr.bf16.gmra.mxu0 %v103
    %v281 = vpop.f32.mrf.mxu0
    %v282 = vadd.f32 0.0, %v281
    %v283 = vpop.f32.mrf.mxu0
    %v284 = vpop.f32.mrf.mxu0
    %v285 = vadd.f32 0.0, %v284
    %v286 = vpop.f32.mrf.mxu0
    %287 = vmatprep.mubr.bf16.mxu0 0
    %288 = vmatmul.mubr.bf16.gmra.mxu0 %v106
    %v289 = vpop.f32.mrf.mxu0
    %v290 = vadd.f32 0.0, %v289
    %v291 = vpop.f32.mrf.mxu0
    %v292 = vpop.f32.mrf.mxu0
    %v293 = vpop.f32.mrf.mxu0
    %294 = vmatprep.mubr.bf16.mxu0 0
    %295 = vmatmul.mubr.bf16.gmra.mxu0 %v109
    %v296 = vpop.f32.mrf.mxu0
    %v297 = vpop.f32.mrf.mxu0
    %v298 = vpop.f32.mrf.mxu0
    %v299 = vpop.f32.mrf.mxu0
    %300 = vdwg.mxu0
    %v301 = vadd.f32 %v150, %v261
    %v302 = vadd.f32 %v153, %v266
    %v303 = vadd.f32 %v158, %v269
    %v304 = vadd.f32 %v161, %v274
    %v305 = vadd.f32 %v166, %v277
    %v306 = vadd.f32 %v169, %v282
    %v307 = vadd.f32 %v174, %v285
    %v308 = vadd.f32 %v177, %v290
    %s309 = scalar_lea.vmem %s1, 56
    %v310 = vld [vmem:[%s309] sm:$0xf]
    %v311 = vld [vmem:[%s309 + $0x4] sm:$0xf]
    %v312 = vld [vmem:[%s309 + $0x8] sm:$0xf]
    %v313 = vld [vmem:[%s309 + $0xc] sm:$0xf]
    %v314 = vld [vmem:[%s309 + $0x10] sm:$0xf]
    %v315 = vld [vmem:[%s309 + $0x14] sm:$0xf]
    %v316 = vld [vmem:[%s309 + $0x18] sm:$0x1]
    %v324 = vunpack.c.l.b16 %v310
    %v325 = vunpack.c.l.b16 %v311
    %v326 = vunpack.c.l.b16 %v312
    %v327 = vunpack.c.l.b16 %v313
    %v328 = vunpack.c.l.b16 %v314
    %v329 = vunpack.c.l.b16 %v315
    %v330 = vunpack.c.l.b16 %v316
    %v331 = vpack.c.b16 %v325, %v324
    %v332 = vpack.c.b16 %v327, %v326
    %v333 = vpack.c.b16 %v329, %v328
    %v334 = vpack.c.b16 %v330, %v330
    %v339 = vsel %vm111, %v334, 0
    %341 = vmatprep.subr.bf16.mxu0 0
    %342 = vmatpush1.bf16.msra.mxu0 0
    %343 = vmatprep.subr.bf16.mxu0 0
    %344 = vmatpush1.bf16.msra.mxu0 0
    %345 = vmatprep.subr.bf16.mxu0 0
    %346 = vmatpush1.bf16.msra.mxu0 0
    %347 = vmatprep.subr.bf16.mxu0 0
    %348 = vmatpush1.bf16.msra.mxu0 0
    %349 = vmatprep.subr.bf16.mxu0 0
    %350 = vmatpush1.bf16.msra.mxu0 %v339
    %351 = vmatprep.subr.bf16.mxu0 0
    %352 = vmatpush1.bf16.msra.mxu0 %v333
    %353 = vmatprep.subr.bf16.mxu0 0
    %354 = vmatpush1.bf16.msra.mxu0 %v332
    %355 = vmatprep.subr.bf16.mxu0 0
    %356 = vmatpush1.bf16.msra.mxu0 %v331
    %357 = vmatprep.subr.bf16.mxu0 0
    %358 = vmatpush2.bf16.msra.mxu0 0
    %359 = vmatprep.subr.bf16.mxu0 0
    %360 = vmatpush2.bf16.msra.mxu0 0
    %361 = vmatprep.subr.bf16.mxu0 0
    %362 = vmatpush2.bf16.msra.mxu0 0
    %363 = vmatprep.subr.bf16.mxu0 0
    %364 = vmatpush2.bf16.msra.mxu0 0
    %365 = vmatprep.subr.bf16.mxu0 0
    %366 = vmatpush2.bf16.msra.mxu0 0
    %367 = vmatprep.subr.bf16.mxu0 0
    %368 = vmatpush2.bf16.msra.mxu0 0
    %369 = vmatprep.subr.bf16.mxu0 0
    %370 = vmatpush2.bf16.msra.mxu0 0
    %371 = vmatprep.subr.bf16.mxu0 0
    %372 = vmatpush2.bf16.msra.mxu0 0
    %373 = vmatprep.mubr.bf16.mxu0 0
    %374 = vmatmul.mubr.bf16.gmra.mxu0 %v94
    %v375 = vpop.f32.mrf.mxu0
    %v376 = vpop.f32.mrf.mxu0
    %v377 = vpop.f32.mrf.mxu0
    %v378 = vpop.f32.mrf.mxu0
    %379 = vmatprep.mubr.bf16.mxu0 0
    %380 = vmatmul.mubr.bf16.gmra.mxu0 %v97
    %v381 = vpop.f32.mrf.mxu0
    %v382 = vadd.f32 0.0, %v381
    %v383 = vpop.f32.mrf.mxu0
    %v384 = vpop.f32.mrf.mxu0
    %v385 = vadd.f32 0.0, %v384
    %v386 = vpop.f32.mrf.mxu0
    %387 = vmatprep.mubr.bf16.mxu0 0
    %388 = vmatmul.mubr.bf16.gmra.mxu0 %v100
    %v389 = vpop.f32.mrf.mxu0
    %v390 = vadd.f32 0.0, %v389
    %v391 = vpop.f32.mrf.mxu0
    %v392 = vpop.f32.mrf.mxu0
    %v393 = vadd.f32 0.0, %v392
    %v394 = vpop.f32.mrf.mxu0
    %395 = vmatprep.mubr.bf16.mxu0 0
    %396 = vmatmul.mubr.bf16.gmra.mxu0 %v103
    %v397 = vpop.f32.mrf.mxu0
    %v398 = vadd.f32 0.0, %v397
    %v399 = vpop.f32.mrf.mxu0
    %v400 = vpop.f32.mrf.mxu0
    %v401 = vadd.f32 0.0, %v400
    %v402 = vpop.f32.mrf.mxu0
    %403 = vmatprep.mubr.bf16.mxu0 0
    %404 = vmatmul.mubr.bf16.gmra.mxu0 %v106
    %v405 = vpop.f32.mrf.mxu0
    %v406 = vadd.f32 0.0, %v405
    %v407 = vpop.f32.mrf.mxu0
    %v408 = vpop.f32.mrf.mxu0
    %v409 = vadd.f32 0.0, %v408
    %v410 = vpop.f32.mrf.mxu0
    %411 = vmatprep.mubr.bf16.mxu0 0
    %412 = vmatmul.mubr.bf16.gmra.mxu0 %v109
    %v413 = vpop.f32.mrf.mxu0
    %v414 = vpop.f32.mrf.mxu0
    %v415 = vpop.f32.mrf.mxu0
    %v416 = vpop.f32.mrf.mxu0
    %417 = vdwg.mxu0
    %v418 = vadd.f32 %v301, %v382
    %v419 = vadd.f32 %v302, %v385
    %v420 = vadd.f32 %v303, %v390
    %v421 = vadd.f32 %v304, %v393
    %v422 = vadd.f32 %v305, %v398
    %v423 = vadd.f32 %v306, %v401
    %v424 = vadd.f32 %v307, %v406
    %v425 = vadd.f32 %v308, %v409
    %s426 = scalar_lea.vmem %s1, 84
    %v427 = vld [vmem:[%s426] sm:$0xf]
    %v428 = vld [vmem:[%s426 + $0x4] sm:$0xf]
    %v429 = vld [vmem:[%s426 + $0x8] sm:$0xf]
    %v430 = vld [vmem:[%s426 + $0xc] sm:$0xf]
    %v431 = vld [vmem:[%s426 + $0x10] sm:$0xf]
    %v432 = vld [vmem:[%s426 + $0x14] sm:$0xf]
    %v433 = vld [vmem:[%s426 + $0x18] sm:$0x1]
    %v441 = vunpack.c.l.b16 %v427
    %v442 = vunpack.c.l.b16 %v428
    %v443 = vunpack.c.l.b16 %v429
    %v444 = vunpack.c.l.b16 %v430
    %v445 = vunpack.c.l.b16 %v431
    %v446 = vunpack.c.l.b16 %v432
    %v447 = vunpack.c.l.b16 %v433
    %v448 = vpack.c.b16 %v442, %v441
    %v449 = vpack.c.b16 %v444, %v443
    %v450 = vpack.c.b16 %v446, %v445
    %v451 = vpack.c.b16 %v447, %v447
    %v456 = vsel %vm111, %v451, 0
    %458 = vmatprep.subr.bf16.mxu0 0
    %459 = vmatpush1.bf16.msra.mxu0 0
    %460 = vmatprep.subr.bf16.mxu0 0
    %461 = vmatpush1.bf16.msra.mxu0 0
    %462 = vmatprep.subr.bf16.mxu0 0
    %463 = vmatpush1.bf16.msra.mxu0 0
    %464 = vmatprep.subr.bf16.mxu0 0
    %465 = vmatpush1.bf16.msra.mxu0 0
    %466 = vmatprep.subr.bf16.mxu0 0
    %467 = vmatpush1.bf16.msra.mxu0 %v456
    %468 = vmatprep.subr.bf16.mxu0 0
    %469 = vmatpush1.bf16.msra.mxu0 %v450
    %470 = vmatprep.subr.bf16.mxu0 0
    %471 = vmatpush1.bf16.msra.mxu0 %v449
    %472 = vmatprep.subr.bf16.mxu0 0
    %473 = vmatpush1.bf16.msra.mxu0 %v448
    %474 = vmatprep.subr.bf16.mxu0 0
    %475 = vmatpush2.bf16.msra.mxu0 0
    %476 = vmatprep.subr.bf16.mxu0 0
    %477 = vmatpush2.bf16.msra.mxu0 0
    %478 = vmatprep.subr.bf16.mxu0 0
    %479 = vmatpush2.bf16.msra.mxu0 0
    %480 = vmatprep.subr.bf16.mxu0 0
    %481 = vmatpush2.bf16.msra.mxu0 0
    %482 = vmatprep.subr.bf16.mxu0 0
    %483 = vmatpush2.bf16.msra.mxu0 0
    %484 = vmatprep.subr.bf16.mxu0 0
    %485 = vmatpush2.bf16.msra.mxu0 0
    %486 = vmatprep.subr.bf16.mxu0 0
    %487 = vmatpush2.bf16.msra.mxu0 0
    %488 = vmatprep.subr.bf16.mxu0 0
    %489 = vmatpush2.bf16.msra.mxu0 0
    %490 = vmatprep.mubr.bf16.mxu0 0
    %491 = vmatmul.mubr.bf16.gmra.mxu0 %v94
    %v492 = vpop.f32.mrf.mxu0
    %v493 = vpop.f32.mrf.mxu0
    %v494 = vpop.f32.mrf.mxu0
    %v495 = vpop.f32.mrf.mxu0
    %496 = vmatprep.mubr.bf16.mxu0 0
    %497 = vmatmul.mubr.bf16.gmra.mxu0 %v97
    %v498 = vpop.f32.mrf.mxu0
    %v499 = vpop.f32.mrf.mxu0
    %v500 = vpop.f32.mrf.mxu0
    %v501 = vadd.f32 0.0, %v500
    %v502 = vpop.f32.mrf.mxu0
    %503 = vmatprep.mubr.bf16.mxu0 0
    %504 = vmatmul.mubr.bf16.gmra.mxu0 %v100
    %v505 = vpop.f32.mrf.mxu0
    %v506 = vadd.f32 0.0, %v505
    %v507 = vpop.f32.mrf.mxu0
    %v508 = vpop.f32.mrf.mxu0
    %v509 = vadd.f32 0.0, %v508
    %v510 = vpop.f32.mrf.mxu0
    %511 = vmatprep.mubr.bf16.mxu0 0
    %512 = vmatmul.mubr.bf16.gmra.mxu0 %v103
    %v513 = vpop.f32.mrf.mxu0
    %v514 = vadd.f32 0.0, %v513
    %v515 = vpop.f32.mrf.mxu0
    %v516 = vpop.f32.mrf.mxu0
    %v517 = vadd.f32 0.0, %v516
    %v518 = vpop.f32.mrf.mxu0
    %519 = vmatprep.mubr.bf16.mxu0 0
    %520 = vmatmul.mubr.bf16.gmra.mxu0 %v106
    %v521 = vpop.f32.mrf.mxu0
    %v522 = vadd.f32 0.0, %v521
    %v523 = vpop.f32.mrf.mxu0
    %v524 = vpop.f32.mrf.mxu0
    %v525 = vadd.f32 0.0, %v524
    %v526 = vpop.f32.mrf.mxu0
    %527 = vmatprep.mubr.bf16.mxu0 0
    %528 = vmatmul.mubr.bf16.gmra.mxu0 %v109
    %v529 = vpop.f32.mrf.mxu0
    %v530 = vadd.f32 0.0, %v529
    %v531 = vpop.f32.mrf.mxu0
    %v532 = vpop.f32.mrf.mxu0
    %v533 = vpop.f32.mrf.mxu0
    %534 = vdwg.mxu0
    %v535 = vadd.f32 %v418, %v501
    %v536 = vadd.f32 %v419, %v506
    %v537 = vadd.f32 %v420, %v509
    %v538 = vadd.f32 %v421, %v514
    %v539 = vadd.f32 %v422, %v517
    %v540 = vadd.f32 %v423, %v522
    %v541 = vadd.f32 %v424, %v525
    %v542 = vadd.f32 %v425, %v530
    %s543 = scalar_lea.vmem %s1, 112
    %v544 = vld [vmem:[%s543] sm:$0xf]
    %v545 = vld [vmem:[%s543 + $0x4] sm:$0xf]
    %v546 = vld [vmem:[%s543 + $0x8] sm:$0xf]
    %v547 = vld [vmem:[%s543 + $0xc] sm:$0xf]
    %v548 = vld [vmem:[%s543 + $0x10] sm:$0xf]
    %v549 = vld [vmem:[%s543 + $0x14] sm:$0xf]
    %v550 = vld [vmem:[%s543 + $0x18] sm:$0x1]
    %v558 = vunpack.c.l.b16 %v544
    %v559 = vunpack.c.l.b16 %v545
    %v560 = vunpack.c.l.b16 %v546
    %v561 = vunpack.c.l.b16 %v547
    %v562 = vunpack.c.l.b16 %v548
    %v563 = vunpack.c.l.b16 %v549
    %v564 = vunpack.c.l.b16 %v550
    %v565 = vpack.c.b16 %v559, %v558
    %v566 = vpack.c.b16 %v561, %v560
    %v567 = vpack.c.b16 %v563, %v562
    %v568 = vpack.c.b16 %v564, %v564
    %v573 = vsel %vm111, %v568, 0
    %575 = vmatprep.subr.bf16.mxu0 0
    %576 = vmatpush1.bf16.msra.mxu0 0
    %577 = vmatprep.subr.bf16.mxu0 0
    %578 = vmatpush1.bf16.msra.mxu0 0
    %579 = vmatprep.subr.bf16.mxu0 0
    %580 = vmatpush1.bf16.msra.mxu0 0
    %581 = vmatprep.subr.bf16.mxu0 0
    %582 = vmatpush1.bf16.msra.mxu0 0
    %583 = vmatprep.subr.bf16.mxu0 0
    %584 = vmatpush1.bf16.msra.mxu0 %v573
    %585 = vmatprep.subr.bf16.mxu0 0
    %586 = vmatpush1.bf16.msra.mxu0 %v567
    %587 = vmatprep.subr.bf16.mxu0 0
    %588 = vmatpush1.bf16.msra.mxu0 %v566
    %589 = vmatprep.subr.bf16.mxu0 0
    %590 = vmatpush1.bf16.msra.mxu0 %v565
    %591 = vmatprep.subr.bf16.mxu0 0
    %592 = vmatpush2.bf16.msra.mxu0 0
    %593 = vmatprep.subr.bf16.mxu0 0
    %594 = vmatpush2.bf16.msra.mxu0 0
    %595 = vmatprep.subr.bf16.mxu0 0
    %596 = vmatpush2.bf16.msra.mxu0 0
    %597 = vmatprep.subr.bf16.mxu0 0
    %598 = vmatpush2.bf16.msra.mxu0 0
    %599 = vmatprep.subr.bf16.mxu0 0
    %600 = vmatpush2.bf16.msra.mxu0 0
    %601 = vmatprep.subr.bf16.mxu0 0
    %602 = vmatpush2.bf16.msra.mxu0 0
    %603 = vmatprep.subr.bf16.mxu0 0
    %604 = vmatpush2.bf16.msra.mxu0 0
    %605 = vmatprep.subr.bf16.mxu0 0
    %606 = vmatpush2.bf16.msra.mxu0 0
    %607 = vmatprep.mubr.bf16.mxu0 0
    %608 = vmatmul.mubr.bf16.gmra.mxu0 %v94
    %v609 = vpop.f32.mrf.mxu0
    %v610 = vpop.f32.mrf.mxu0
    %v611 = vpop.f32.mrf.mxu0
    %v612 = vpop.f32.mrf.mxu0
    %613 = vmatprep.mubr.bf16.mxu0 0
    %614 = vmatmul.mubr.bf16.gmra.mxu0 %v97
    %v615 = vpop.f32.mrf.mxu0
    %v616 = vpop.f32.mrf.mxu0
    %v617 = vpop.f32.mrf.mxu0
    %v618 = vpop.f32.mrf.mxu0
    %619 = vmatprep.mubr.bf16.mxu0 0
    %620 = vmatmul.mubr.bf16.gmra.mxu0 %v100
    %v621 = vpop.f32.mrf.mxu0
    %v622 = vadd.f32 0.0, %v621
    %v623 = vpop.f32.mrf.mxu0
    %v624 = vpop.f32.mrf.mxu0
    %v625 = vadd.f32 0.0, %v624
    %v626 = vpop.f32.mrf.mxu0
    %627 = vmatprep.mubr.bf16.mxu0 0
    %628 = vmatmul.mubr.bf16.gmra.mxu0 %v103
    %v629 = vpop.f32.mrf.mxu0
    %v630 = vadd.f32 0.0, %v629
    %v631 = vpop.f32.mrf.mxu0
    %v632 = vpop.f32.mrf.mxu0
    %v633 = vadd.f32 0.0, %v632
    %v634 = vpop.f32.mrf.mxu0
    %635 = vmatprep.mubr.bf16.mxu0 0
    %636 = vmatmul.mubr.bf16.gmra.mxu0 %v106
    %v637 = vpop.f32.mrf.mxu0
    %v638 = vadd.f32 0.0, %v637
    %v639 = vpop.f32.mrf.mxu0
    %v640 = vpop.f32.mrf.mxu0
    %v641 = vadd.f32 0.0, %v640
    %v642 = vpop.f32.mrf.mxu0
    %643 = vmatprep.mubr.bf16.mxu0 0
    %644 = vmatmul.mubr.bf16.gmra.mxu0 %v109
    %v645 = vpop.f32.mrf.mxu0
    %v646 = vadd.f32 0.0, %v645
    %v647 = vpop.f32.mrf.mxu0
    %v648 = vpop.f32.mrf.mxu0
    %v649 = vadd.f32 0.0, %v648
    %v650 = vpop.f32.mrf.mxu0
    %651 = vdwg.mxu0
    %v652 = vadd.f32 %v535, %v622
    %v653 = vadd.f32 %v536, %v625
    %v654 = vadd.f32 %v537, %v630
    %v655 = vadd.f32 %v538, %v633
    %v656 = vadd.f32 %v539, %v638
    %v657 = vadd.f32 %v540, %v641
    %v658 = vadd.f32 %v541, %v646
    %v659 = vadd.f32 %v542, %v649
    %v660 = vmax.f32 %v652, %v656
    %v661 = vmax.f32 %v653, %v657
    %v662 = vmax.f32 %v654, %v658
    %v663 = vmax.f32 %v655, %v659
    %v664 = vmax.f32 %v660, %v661
    %v665 = vmax.f32 %v662, %v663
    %v666 = vmax.f32 %v664, %v665
    %v667 = vld [vmem:[%s2] sm:$0x1]
    %v669 = vlaneseq
    %v670 = vshrl.u32 %v669, 7
    %v671 = vsub.s32 0, %v670
    %v672 = vrot.slane %v667, %v671
    %v674 = vadd.f32 %v666, %v672
    %v675 = vmax.f32 %v674, 0.0
    %v676 = vpack.c.bf16 %v675, %v675
    %v677 = vld [vmem:[%s3] sm:$0xff]
    %v678 = vld [vmem:[%s3 + $0x8] sm:$0xff]
    %v679 = vld [vmem:[%s3 + $0x10] sm:$0xff]
    %v680 = vld [vmem:[%s3 + $0x18] sm:$0xff]
    %v681 = vld [vmem:[%s3 + $0x20] sm:$0xff]
    %v682 = vld [vmem:[%s3 + $0x28] sm:$0xff]
    %v683 = vld [vmem:[%s3 + $0x30] sm:$0xff]
    %v684 = vld [vmem:[%s3 + $0x38] sm:$0xff]
    %v685 = vld [vmem:[%s3 + $0x40] sm:$0xff]
    %v686 = vld [vmem:[%s3 + $0x48] sm:$0xff]
    %v687 = vld [vmem:[%s3 + $0x50] sm:$0xff]
    %v688 = vld [vmem:[%s3 + $0x58] sm:$0xff]
    %v689 = vld [vmem:[%s3 + $0x60] sm:$0xff]
    %v690 = vld [vmem:[%s3 + $0x68] sm:$0xff]
    %v691 = vld [vmem:[%s3 + $0x70] sm:$0xff]
    %v692 = vld [vmem:[%s3 + $0x78] sm:$0xff]
    %v693 = vld [vmem:[%s4] sm:$0x3]
    %v695 = vlaneseq
    %v696 = vshrl.u32 %v695, 7
    %v697 = vsub.s32 0, %v696
    %v698 = vrot.slane %v693, %v697
    %v699 = vlaneseq
    %v700 = vshrl.u32 %v699, 7
    %v701 = vsub.s32 1, %v700
    %v702 = vrot.slane %v693, %v701
    %v721 = vunpack.c.l.b16 %v677
    %v722 = vunpack.c.h.b16 %v677
    %v723 = vunpack.c.l.b16 %v678
    %v724 = vunpack.c.h.b16 %v678
    %v725 = vunpack.c.l.b16 %v679
    %v726 = vunpack.c.h.b16 %v679
    %v727 = vunpack.c.l.b16 %v680
    %v728 = vunpack.c.h.b16 %v680
    %v729 = vunpack.c.l.b16 %v681
    %v730 = vunpack.c.h.b16 %v681
    %v731 = vunpack.c.l.b16 %v682
    %v732 = vunpack.c.h.b16 %v682
    %v733 = vunpack.c.l.b16 %v683
    %v734 = vunpack.c.h.b16 %v683
    %v735 = vunpack.c.l.b16 %v684
    %v736 = vunpack.c.h.b16 %v684
    %v737 = vunpack.c.l.b16 %v685
    %v738 = vunpack.c.h.b16 %v685
    %v739 = vunpack.c.l.b16 %v686
    %v740 = vunpack.c.h.b16 %v686
    %v741 = vunpack.c.l.b16 %v687
    %v742 = vunpack.c.h.b16 %v687
    %v743 = vunpack.c.l.b16 %v688
    %v744 = vunpack.c.h.b16 %v688
    %v745 = vunpack.c.l.b16 %v689
    %v746 = vunpack.c.h.b16 %v689
    %v747 = vunpack.c.l.b16 %v690
    %v748 = vunpack.c.h.b16 %v690
    %v749 = vunpack.c.l.b16 %v691
    %v750 = vunpack.c.h.b16 %v691
    %v751 = vunpack.c.l.b16 %v692
    %v752 = vunpack.c.h.b16 %v692
    %v753 = vpack.c.b16 %v723, %v721
    %v754 = vpack.c.b16 %v724, %v722
    %v755 = vpack.c.b16 %v727, %v725
    %v756 = vpack.c.b16 %v728, %v726
    %v757 = vpack.c.b16 %v731, %v729
    %v758 = vpack.c.b16 %v732, %v730
    %v759 = vpack.c.b16 %v735, %v733
    %v760 = vpack.c.b16 %v736, %v734
    %v761 = vpack.c.b16 %v739, %v737
    %v762 = vpack.c.b16 %v740, %v738
    %v763 = vpack.c.b16 %v743, %v741
    %v764 = vpack.c.b16 %v744, %v742
    %v765 = vpack.c.b16 %v747, %v745
    %v766 = vpack.c.b16 %v748, %v746
    %v767 = vpack.c.b16 %v751, %v749
    %v768 = vpack.c.b16 %v752, %v750
    %785 = vmatprep.subr.bf16.mxu0 %v768
    %786 = vmatpush1.bf16.msra.mxu0 %v767
    %787 = vmatprep.subr.bf16.mxu0 %v766
    %788 = vmatpush1.bf16.msra.mxu0 %v765
    %789 = vmatprep.subr.bf16.mxu0 %v764
    %790 = vmatpush1.bf16.msra.mxu0 %v763
    %791 = vmatprep.subr.bf16.mxu0 %v762
    %792 = vmatpush1.bf16.msra.mxu0 %v761
    %793 = vmatprep.subr.bf16.mxu0 %v760
    %794 = vmatpush1.bf16.msra.mxu0 %v759
    %795 = vmatprep.subr.bf16.mxu0 %v758
    %796 = vmatpush1.bf16.msra.mxu0 %v757
    %797 = vmatprep.subr.bf16.mxu0 %v756
    %798 = vmatpush1.bf16.msra.mxu0 %v755
    %799 = vmatprep.subr.bf16.mxu0 %v754
    %800 = vmatpush1.bf16.msra.mxu0 %v753
    %801 = vmatprep.subr.bf16.mxu0 0
    %802 = vmatpush2.bf16.msra.mxu0 0
    %803 = vmatprep.subr.bf16.mxu0 0
    %804 = vmatpush2.bf16.msra.mxu0 0
    %805 = vmatprep.subr.bf16.mxu0 0
    %806 = vmatpush2.bf16.msra.mxu0 0
    %807 = vmatprep.subr.bf16.mxu0 0
    %808 = vmatpush2.bf16.msra.mxu0 0
    %809 = vmatprep.subr.bf16.mxu0 0
    %810 = vmatpush2.bf16.msra.mxu0 0
    %811 = vmatprep.subr.bf16.mxu0 0
    %812 = vmatpush2.bf16.msra.mxu0 0
    %813 = vmatprep.subr.bf16.mxu0 0
    %814 = vmatpush2.bf16.msra.mxu0 0
    %815 = vmatprep.subr.bf16.mxu0 0
    %816 = vmatpush2.bf16.msra.mxu0 0
    %817 = vmatprep.mubr.bf16.mxu0 0
    %818 = vmatmul.mubr.bf16.gmra.mxu0 %v676
    %v819 = vpop.f32.mrf.mxu0
    %v820 = vadd.f32 %v698, %v819
    %v821 = vpop.f32.mrf.mxu0
    %v822 = vadd.f32 %v702, %v821
    %v823 = vpop.f32.mrf.mxu0
    %v824 = vpop.f32.mrf.mxu0
    %825 = vdwg.mxu0
    %v826 = vmax.f32 %v820, 0.0
    %v827 = vxor.u32 %v822, 2147483648
    %v828 = vmul.f32 %v827, 1.442695
    %v829 = vpow.pop %v828
    %v830 = vadd.f32 %v829, 1.0
    %v831 = vrcp.pop %v830
    %v832 = vmul.f32 1.0, %v831
    %v833 = vmul.f32 %v832, %v826
    %v834 = vsub.f32 1.0, %v832
    %v835 = vmul.f32 %v834, %v675
    %v836 = vadd.f32 %v833, %v835
    %837 = vst [vmem:[#allocation2] sm:$0xff] %v836
    // Predicated region
    $region22: #{model_embeddings_forward.1} parent=1 // pred_check
      _
    $region23: #{model_embeddings_forward.1} parent=1 // pred_check_branch
      %839 = sbr.rel (0) target = $region25
    $region24: #{model_embeddings_forward.1} parent=1 // pred_region
      %s841 = ssub.s32 128, 128
      %842 = vsyncadd [#allocation3], %s841
      %s844 = sshll.u32 [#allocation2], 4
      %s845 = int_to_ptr.vmem [resolvable:$true] %s844
      %847 = dma.vmem_to_hbm [thread:$0]  %s845, 128, %s5, [#allocation3]
    $region25: #{model_embeddings_forward.1} parent=1 // pred_fallthru
      _
    // Predicated region
    $region26: #{model_embeddings_forward.1} parent=1 // pred_check
      _
    $region27: #{model_embeddings_forward.1} parent=1 // pred_check_branch
      %849 = sbr.rel (0) target = $region29
    $region28: #{model_embeddings_forward.1} parent=1 // pred_region
      %850 = dma.done [#allocation3], 128
    $region29: #{model_embeddings_forward.1} parent=1 // pred_fallthru
      _
    %851 = vsyncpa [#allocation3], 1

</llo_original>
